<compile_context>
chip_gen: v7x
topology: tpu7x:2x2x1
jax: 0.10.0
libtpu: 0.0.40
codegen_flags: <defaults>
</compile_context>

<pallas_src>
import functools

import jax
import jax.numpy as jnp
from jax.experimental import pallas as pl
from jax.experimental.pallas import tpu as pltpu


def _round_up(x, m):
    return ((x + m - 1) // m) * m


# ----------------------------------------------------------------------------
# Pallas kernel: fused ctc_lo (Linear) + log_softmax over the (padded) odim.
# ----------------------------------------------------------------------------
def _linear_logsoftmax_kernel(x_ref, w_ref, b_ref, o_ref):
    # x_ref: (TM, D) bf16, w_ref: (D, Cp) bf16, b_ref: (1, Cp) f32,
    # o_ref: (TM, Cp) f32.  MXU matmul with f32 accumulation; softmax in f32.
    logits = jnp.dot(x_ref[...], w_ref[...],
                     preferred_element_type=jnp.float32) + b_ref[...]
    m = jnp.max(logits, axis=-1, keepdims=True)
    z = logits - m
    lse = jnp.log(jnp.sum(jnp.exp(z), axis=-1, keepdims=True))
    o_ref[...] = (z - lse).astype(o_ref.dtype)


def _choose_tile_rows(n_rows, d, c_pad, *, max_rows=1024,
                      vmem_budget_bytes=24 * 1024 * 1024):
    """Pick the largest row tile that fits a conservative VMEM budget.

    Budget accounts for double-buffered x (bf16) and output (f32) tiles plus
    the grid-constant weight/bias blocks (conservatively counted twice).  The
    24 MiB budget stays under the scoped-VMEM default on v6e/v7x (32 MiB) and
    well under v7x's 64 MiB physical VMEM.
    """
    const_bytes = 2 * (d * c_pad * 2 + c_pad * 4)
    per_row_bytes = 2 * (d * 2 + c_pad * 4)
    tm = (vmem_budget_bytes - const_bytes) // per_row_bytes
    tm = max(8, min(max_rows, tm))
    # Keep >= 4 grid steps (megacore sharding on v7x) when there is enough
    # work to still use >=256-row tiles.
    if n_rows >= 4 * 256:
        tm = min(tm, max(256, -(-n_rows // 4)))
    # Prefer a 128-multiple (full MXU M dim on v5e), else a sublane multiple.
    if tm >= 128:
        tm = (tm // 128) * 128
    else:
        tm = (tm // 8) * 8
    # Never exceed the (sublane-padded) row count.
    tm = min(tm, _round_up(n_rows, 8))
    return max(tm, 8)


def pallas_linear_logsoftmax(x, w, b, *, tile_rows=None,
                             vmem_limit_bytes=48 * 1024 * 1024):
    """log_softmax(x @ w + b, axis=-1) with a lane-dense padded class dim.

    x: (N, D), w: (D, C), b: (C,).  Returns (N, C_pad) float32 with
    C_pad = round_up(C, 128).  Columns [0, C) are the exact log-softmax over
    the C real classes (padded classes carry -1e30 bias so they contribute
    zero probability mass); columns >= C must be ignored by the caller.
    """
    N, D = x.shape
    C = w.shape[1]
    C_pad = _round_up(C, 128)

    # bf16 streaming for the dominant HBM reads; bias stays f32.
    x = x.astype(jnp.bfloat16)
    w_p = jnp.zeros((D, C_pad), jnp.bfloat16).at[:, :C].set(
        w.astype(jnp.bfloat16))
    b_p = jnp.full((1, C_pad), -1e30, jnp.float32).at[0, :C].set(
        b.astype(jnp.float32))

    tm = tile_rows if tile_rows is not None else _choose_tile_rows(N, D, C_pad)
    grid = (pl.cdiv(N, tm),)  # partial last tile is masked by Pallas

    # TODO(synk): for realistic ASR vocabs (C in the many thousands) add a
    # second grid axis over C with an online log-sum-exp so the full (D, C)
    # weight and full-width logits tile need not be VMEM-resident at once.
    return pl.pallas_call(
        _linear_logsoftmax_kernel,
        out_shape=jax.ShapeDtypeStruct((N, C_pad), jnp.float32),
        grid_spec=pltpu.PrefetchScalarGridSpec(
            num_scalar_prefetch=0,
            grid=grid,
            in_specs=[
                pl.BlockSpec((tm, D), lambda i: (i, 0)),
                pl.BlockSpec((D, C_pad), lambda i: (0, 0)),
                pl.BlockSpec((1, C_pad), lambda i: (0, 0)),
            ],
            out_specs=pl.BlockSpec((tm, C_pad), lambda i: (i, 0)),
        ),
        compiler_params=pltpu.CompilerParams(
            dimension_semantics=("parallel",),
            vmem_limit_bytes=vmem_limit_bytes,
        ),
    )(x, w_p, b_p)


# ----------------------------------------------------------------------------
# CTC forward loss (log-space alpha recursion), matching
# torch.nn.CTCLoss(reduction='sum', zero_infinity=True).
# TODO(synk): the alpha DP is a sequential, data-dependent recursion with
# negligible FLOPs vs. the projection matmul; it stays in lax.scan (plain
# JAX) rather than a Pallas kernel.
# ----------------------------------------------------------------------------
def ctc_loss_per_sample(log_probs_btc, targets_pad, hlens, olens, blank=0):
    """log_probs_btc: (B, T, C[_pad]); targets_pad: (B, Lmax) int32."""
    B, T, _ = log_probs_btc.shape
    Lmax = targets_pad.shape[1]
    S = 2 * Lmax + 1
    NEG = jnp.float32(-1e30)

    # Extended label sequence with blanks interleaved: blank, y1, blank, ...
    ext = jnp.full((B, S), blank, dtype=jnp.int32)
    ext = ext.at[:, 1::2].set(targets_pad.astype(jnp.int32))
    svalid = jnp.arange(S)[None, :] < (2 * olens + 1)[:, None]          # (B, S)

    # lp_ext[b, t, s] = log_probs_btc[b, t, ext[b, s]]  (batch-major, no
    # transpose round-trip; padded classes are never indexed).
    idx = jnp.broadcast_to(ext[:, None, :], (B, T, S))
    lp_ext = jnp.take_along_axis(log_probs_btc, idx, axis=2)            # (B, T, S)

    ext_m2 = jnp.concatenate(
        [jnp.full((B, 2), -1, dtype=jnp.int32), ext[:, :-2]], axis=1)
    allow_skip = (ext != blank) & (ext != ext_m2)                       # (B, S)

    alpha0 = jnp.full((B, S), NEG, dtype=jnp.float32)
    alpha0 = alpha0.at[:, 0].set(lp_ext[:, 0, 0])
    alpha0 = alpha0.at[:, 1].set(jnp.where(olens > 0, lp_ext[:, 0, 1], NEG))
    alpha0 = jnp.where(svalid, alpha0, NEG)

    def step(alpha, t):
        a0 = alpha
        a1 = jnp.concatenate(
            [jnp.full((B, 1), NEG, dtype=jnp.float32), alpha[:, :-1]], axis=1)
        a2 = jnp.concatenate(
            [jnp.full((B, 2), NEG, dtype=jnp.float32), alpha[:, :-2]], axis=1)
        a2 = jnp.where(allow_skip, a2, NEG)
        m = jnp.maximum(jnp.maximum(a0, a1), a2)
        s = jnp.exp(a0 - m) + jnp.exp(a1 - m) + jnp.exp(a2 - m)
        new = m + jnp.log(s) + lp_ext[:, t, :]
        new = jnp.where(svalid, new, NEG)
        # Freeze alpha for frames beyond the per-sample input length.
        new = jnp.where((t < hlens)[:, None], new, alpha)
        return new, None

    alpha_final, _ = jax.lax.scan(step, alpha0, jnp.arange(1, T))

    idx_last = (2 * olens).astype(jnp.int32)
    idx_prev = jnp.maximum(idx_last - 1, 0)      # clamp olens==0 edge case
    a_last = jnp.take_along_axis(alpha_final, idx_last[:, None], axis=1)[:, 0]
    a_prev = jnp.take_along_axis(alpha_final, idx_prev[:, None], axis=1)[:, 0]
    a_prev = jnp.where(olens > 0, a_prev, NEG)   # empty target: blank path only
    m = jnp.maximum(a_last, a_prev)
    ll = m + jnp.log(jnp.exp(a_last - m) + jnp.exp(a_prev - m))
    loss = -ll
    # zero_infinity=True
    loss = jnp.where(jnp.isfinite(loss) & (loss < 1e29), loss, 0.0)
    return loss                                                         # (B,)


# ----------------------------------------------------------------------------
# CTC.forward equivalent (ctc_type='builtin', reduce=True, dropout=identity).
# TODO(synk): warpctc/gtnctc/cudnnctc branches and the knowledge-distillation
# path are not modeled; dropout_rate > 0 (random mask) is not modeled.
# ----------------------------------------------------------------------------
@functools.partial(jax.jit, static_argnames=("ignore_id", "blank"))
def ctc_forward(hs_pad, hlens, ys_pad, w, b, *, ignore_id=-1, blank=0):
    B, T, D = hs_pad.shape

    # ys_hat = ctc_lo(dropout(hs_pad)); dropout == identity here.
    x2d = hs_pad.reshape(B * T, D)
    logp2d = pallas_linear_logsoftmax(x2d, w, b)           # (B*T, C_pad) f32

    # Keep the batch-major (B, T, C_pad) layout: the (T, B, C) transpose in
    # the torch reference is only the torch.nn.CTCLoss calling convention;
    # the DP below consumes (B, T, C) directly (no transpose round-trip).
    log_probs = logp2d.reshape(B, T, -1)

    # ys = [y[y != ignore_id] for y in ys_pad]; olens = per-sample lengths.
    mask = ys_pad != ignore_id
    olens = jnp.sum(mask, axis=1).astype(jnp.int32)
    targets_pad = jnp.where(mask, ys_pad, 0).astype(jnp.int32)

    per_sample = ctc_loss_per_sample(
        log_probs, targets_pad, hlens.astype(jnp.int32), olens, blank=blank)
    # CTCLoss(reduction='sum') followed by "loss / th_pred.size(1)" (== B);
    # reduce=True's .sum() is a no-op on the scalar.
    return jnp.sum(per_sample) / B


if __name__ == "__main__":
    # Small shapes consistent with CTC(odim=16, eprojs=32, dropout_rate=0.0).
    B, T, D, C = 2, 8, 32, 16
    key = jax.random.PRNGKey(0)
    k1, k2, k3 = jax.random.split(key, 3)

    hs_pad = jax.random.normal(k1, (B, T, D), dtype=jnp.float32)
    hlens = jnp.array([8, 6], dtype=jnp.int32)
    # Padded label ids (ignore_id = -1), blank id = 0, labels in [1, C-1].
    ys_pad = jnp.array([[3, 5, 2, -1],
                        [7, 1, -1, -1]], dtype=jnp.int32)

    # Deterministic ctc_lo parameters (nn.Linear(eprojs, odim) init scheme).
    bound = 1.0 / (D ** 0.5)
    w = jax.random.uniform(k2, (D, C), minval=-bound, maxval=bound,
                           dtype=jnp.float32)
    b = jax.random.uniform(k3, (C,), minval=-bound, maxval=bound,
                           dtype=jnp.float32)

    loss = ctc_forward(hs_pad, hlens, ys_pad, w, b)
    jax.block_until_ready(loss)
    assert loss.shape == () and jnp.isfinite(loss)
    print("KERNEL_OK")
</pallas_src>

<mosaic_0001>
module attributes {stable_mosaic.version = 11 : i64} {
  func.func @_linear_logsoftmax_kernel(%arg0: i32, %arg1: memref<16x32xbf16, #tpu.memory_space<vmem>>, %arg2: memref<32x128xbf16, #tpu.memory_space<vmem>>, %arg3: memref<1x128xf32, #tpu.memory_space<vmem>>, %arg4: memref<16x128xf32, #tpu.memory_space<vmem>>) attributes {dimension_semantics = [#tpu.dimension_semantics<parallel>], iteration_bounds = array<i64: 1>, scalar_prefetch = 0 : i64, scratch_operands = 0 : i64, tpu.core_type = #tpu.core_type<tc>, window_params = [{transform_indices = @transform_0, window_bounds = array<i64: 16, 32>}, {pipeline_mode = #tpu.pipeline_mode<synchronous>, transform_indices = @transform_1, window_bounds = array<i64: 32, 128>}, {pipeline_mode = #tpu.pipeline_mode<synchronous>, transform_indices = @transform_2, window_bounds = array<i64: 1, 128>}, {transform_indices = @transform_3, window_bounds = array<i64: 16, 128>}]} {
    %c0 = arith.constant 0 : index
    %c0_0 = arith.constant 0 : index
    %0 = vector.load %arg1[%c0, %c0_0] : memref<16x32xbf16, #tpu.memory_space<vmem>>, vector<16x32xbf16>
    %c0_1 = arith.constant 0 : index
    %c0_2 = arith.constant 0 : index
    %1 = vector.load %arg2[%c0_1, %c0_2] : memref<32x128xbf16, #tpu.memory_space<vmem>>, vector<32x128xbf16>
    %cst = arith.constant dense<0.000000e+00> : vector<16x128xf32>
    %2 = tpu.matmul %0, %1, %cst {dimension_numbers = #tpu.dot_dimension_numbers<[1], [0], [0], [1], [0, 0, 1, 1], [], []>} : vector<16x32xbf16>, vector<32x128xbf16>, vector<16x128xf32> -> vector<16x128xf32>
    %c0_3 = arith.constant 0 : index
    %c0_4 = arith.constant 0 : index
    %3 = vector.load %arg3[%c0_3, %c0_4] : memref<1x128xf32, #tpu.memory_space<vmem>>, vector<1x128xf32>
    %4 = vector.broadcast %3 : vector<1x128xf32> to vector<16x128xf32>
    %5 = arith.addf %2, %4 : vector<16x128xf32>
    %cst_5 = arith.constant dense<0xFF800000> : vector<16xf32>
    %6 = vector.multi_reduction <maximumf>, %5, %cst_5 [1] : vector<16x128xf32> to vector<16xf32>
    %7 = vector.shape_cast %6 : vector<16xf32> to vector<16x1xf32>
    %8 = vector.broadcast %7 : vector<16x1xf32> to vector<16x128xf32>
    %9 = arith.subf %5, %8 : vector<16x128xf32>
    %10 = math.exp %9 : vector<16x128xf32>
    %cst_6 = arith.constant dense<0.000000e+00> : vector<16xf32>
    %11 = vector.multi_reduction <add>, %10, %cst_6 [1] : vector<16x128xf32> to vector<16xf32>
    %12 = vector.shape_cast %11 : vector<16xf32> to vector<16x1xf32>
    %13 = math.log %12 : vector<16x1xf32>
    %14 = vector.broadcast %13 : vector<16x1xf32> to vector<16x128xf32>
    %15 = arith.subf %9, %14 : vector<16x128xf32>
    %c0_7 = arith.constant 0 : index
    %c0_8 = arith.constant 0 : index
    %16 = vector.load %arg4[%c0_7, %c0_8] : memref<16x128xf32, #tpu.memory_space<vmem>>, vector<16x128xf32>
    tpu.vector_store %arg4[%c0_7, %c0_8], %15 {strides = array<i32>} : memref<16x128xf32, #tpu.memory_space<vmem>>, vector<16x128xf32>,
    return
  }
  func.func @transform_0(%arg0: i32) -> (i32, i32) {
    %c0_i32 = arith.constant 0 : i32
    %c0_i32_0 = arith.constant 0 : i32
    return %arg0, %c0_i32 : i32, i32
  }
  func.func @transform_1(%arg0: i32) -> (i32, i32) {
    %c0_i32 = arith.constant 0 : i32
    %c0_i32_0 = arith.constant 0 : i32
    %c0_i32_1 = arith.constant 0 : i32
    return %c0_i32, %c0_i32_0 : i32, i32
  }
  func.func @transform_2(%arg0: i32) -> (i32, i32) {
    %c0_i32 = arith.constant 0 : i32
    %c0_i32_0 = arith.constant 0 : i32
    %c0_i32_1 = arith.constant 0 : i32
    return %c0_i32, %c0_i32_0 : i32, i32
  }
  func.func @transform_3(%arg0: i32) -> (i32, i32) {
    %c0_i32 = arith.constant 0 : i32
    %c0_i32_0 = arith.constant 0 : i32
    return %arg0, %c0_i32 : i32, i32
  }
}

</mosaic_0001>

<llo_original>
// kernel: ctc_forward.1
$region0: #{ctc_forward.1}
  #allocation0 [shape = 'u32[]', space=smem, size = 0x4, offset = 0x4, fixed_abs, tag = 'smem constant byte address 0x4 - core index']
  #allocation1 [shape = 'u32[144,128]{1,0:T(1,128)}', space=vmem, size = 0x12000, scoped, tag = 'internal scratch']
  %s0 = inlined_call_operand.vmem [shape: bf16[16,32], index: 0, kind: input, shape index: {}]
  %s1 = inlined_call_operand.vmem [shape: bf16[32,128], index: 1, kind: input, shape index: {}]
  %s2 = inlined_call_operand.vmem [shape: f32[1,128], index: 2, kind: input, shape index: {}]
  %s3 = inlined_call_operand.vmem [shape: f32[16,128], index: 3, kind: output, shape index: {}]
  %s4 = sld [smem:[#allocation0]]
  $region22: #{ctc_forward.1} parent=0
    _
  %s6 = ssub.s32 1, %s4
  %s7 = scalar_select 0, %s6, %s4
  // Predicated region
  $region2: #{ctc_forward.1} parent=0 // pred_check
    _
  $region3: #{ctc_forward.1} parent=0 // pred_check_branch
    %9 = sbr.rel (0) target = $region5
  $region4: #{ctc_forward.1} parent=0 // pred_region
    _
  $region5: #{ctc_forward.1} parent=0 // pred_fallthru
    _
  // Predicated region
  $region6: #{ctc_forward.1} parent=0 // pred_check
    _
  $region7: #{ctc_forward.1} parent=0 // pred_check_branch
    %11 = sbr.rel (0) target = $region9
  $region8: #{ctc_forward.1} parent=0 // pred_region
    _
  $region9: #{ctc_forward.1} parent=0 // pred_fallthru
    _
  // Predicated region
  $region10: #{ctc_forward.1} parent=0 // pred_check
    _
  $region11: #{ctc_forward.1} parent=0 // pred_check_branch
    %13 = sbr.rel (0) target = $region13
  $region12: #{ctc_forward.1} parent=0 // pred_region
    _
  $region13: #{ctc_forward.1} parent=0 // pred_fallthru
    _
  %v15 = vld [vmem:[%s0] sm:$0xf]
  %v16 = vld [vmem:[%s0 + $0x4] sm:$0xf]
  %v17 = vld [vmem:[%s1] sm:$0xf]
  %v18 = vld [vmem:[%s1 + $0x4] sm:$0xf]
  %v19 = vld [vmem:[%s1 + $0x8] sm:$0xf]
  %v20 = vld [vmem:[%s1 + $0xc] sm:$0xf]
  %v21 = vld [vmem:[%s2] sm:$0x1]
  %v23 = vlaneseq
  %v24 = vshrl.u32 %v23, 7
  %v25 = vsub.s32 0, %v24
  %v26 = vrot.slane %v21, %v25
  %v30 = vunpack.c.l.b16 %v15
  %v31 = vunpack.c.l.b16 %v16
  %v32 = vpack.c.b16 %v31, %v30
  %v37 = vunpack.c.l.b16 %v17
  %v38 = vunpack.c.l.b16 %v18
  %v39 = vunpack.c.l.b16 %v19
  %v40 = vunpack.c.l.b16 %v20
  %v41 = vpack.c.b16 %v38, %v37
  %v42 = vpack.c.b16 %v40, %v39
  %vm45 = vcmask 261120
  %v47 = vsel %vm45, %v32, 0
  %49 = vmatprep.subr.bf16.mxu0 0
  %50 = vmatpush1.bf16.msra.mxu0 %v41
  %51 = vmatprep.subr.bf16.mxu0 0
  %52 = vmatpush1.bf16.msra.mxu0 %v42
  %53 = vmatprep.subr.bf16.mxu0 0
  %54 = vmatpush1.bf16.msra.mxu0 0
  %55 = vmatprep.subr.bf16.mxu0 0
  %56 = vmatpush1.bf16.msra.mxu0 0
  %57 = vmatprep.subr.bf16.mxu0 0
  %58 = vmatpush1.bf16.msra.mxu0 0
  %59 = vmatprep.subr.bf16.mxu0 0
  %60 = vmatpush1.bf16.msra.mxu0 0
  %61 = vmatprep.subr.bf16.mxu0 0
  %62 = vmatpush1.bf16.msra.mxu0 0
  %63 = vmatprep.subr.bf16.mxu0 0
  %64 = vmatpush1.bf16.msra.mxu0 0
  %65 = vmatprep.subr.bf16.mxu0 0
  %66 = vmatpush1.bf16.msra.mxu0 0
  %67 = vmatprep.subr.bf16.mxu0 0
  %68 = vmatpush1.bf16.msra.mxu0 0
  %69 = vmatprep.subr.bf16.mxu0 0
  %70 = vmatpush1.bf16.msra.mxu0 0
  %71 = vmatprep.subr.bf16.mxu0 0
  %72 = vmatpush1.bf16.msra.mxu0 0
  %73 = vmatprep.subr.bf16.mxu0 0
  %74 = vmatpush1.bf16.msra.mxu0 0
  %75 = vmatprep.subr.bf16.mxu0 0
  %76 = vmatpush1.bf16.msra.mxu0 0
  %77 = vmatprep.subr.bf16.mxu0 0
  %78 = vmatpush1.bf16.msra.mxu0 0
  %79 = vmatprep.subr.bf16.mxu0 0
  %80 = vmatpush1.bf16.msra.mxu0 0
  %81 = vmatprep.mubr.bf16.mxu0 0
  %82 = vmatmul.mubr.bf16.gmra.mrb[0].mxu0 %v47
  %v83 = vpop.f32.mrb[0].mxu0
  %v84 = vadd.f32 %v26, %v83
  %v85 = vpop.f32.mrb[0].mxu0
  %v86 = vpop.f32.mrb[0].mxu0
  %v87 = vadd.f32 %v26, %v86
  %v88 = vpop.f32.mrb[0].mxu0
  %89 = vdwg.mxu0
  %90 = vmax.xlane.f32.xlu0 %v84
  %v91 = vpop.xlane.xlu0 %90
  %92 = vmax.xlane.f32.xlu0 %v87
  %v93 = vpop.xlane.xlu0 %92
  %v94 = vsub.f32 %v84, %v91
  %v95 = vsub.f32 %v87, %v93
  %v96 = vmul.f32 %v94, 1.442695
  %v97 = vpow.pop %v96
  %v98 = vmul.f32 %v95, 1.442695
  %v99 = vpow.pop %v98
  %100 = vadd.xlane.f32.xlu0 %v97
  %v101 = vpop.xlane.xlu0 %100
  %102 = vadd.xlane.f32.xlu0 %v99
  %v103 = vpop.xlane.xlu0 %102
  %v104 = vlog2.pop %v101
  %v105 = vmul.f32 %v104, 0.6931472
  %v106 = vlog2.pop %v103
  %v107 = vmul.f32 %v106, 0.6931472
  %v108 = vsub.f32 %v94, %v105
  %v109 = vsub.f32 %v95, %v107
  %110 = vst [vmem:[%s3] sm:$0xff] %v108
  %111 = vst [vmem:[%s3 + $0x8] sm:$0xff] %v109
  // Predicated region
  $region14: #{ctc_forward.1} parent=0 // pred_check
    _
  $region15: #{ctc_forward.1} parent=0 // pred_check_branch
    %113 = sbr.rel (0) target = $region17
  $region16: #{ctc_forward.1} parent=0 // pred_region
    _
  $region17: #{ctc_forward.1} parent=0 // pred_fallthru
    _
  // Predicated region
  $region18: #{ctc_forward.1} parent=0 // pred_check
    _
  $region19: #{ctc_forward.1} parent=0 // pred_check_branch
    %115 = sbr.rel (0) target = $region21
  $region20: #{ctc_forward.1} parent=0 // pred_region
    _
  $region21: #{ctc_forward.1} parent=0 // pred_fallthru
    _

</llo_original>
